<compile_context>
chip_gen: v7x
topology: tpu7x:2x2x1
jax: 0.10.0
libtpu: 0.0.40
codegen_flags: <defaults>
</compile_context>

<pallas_src>
import functools

import numpy as np
import jax
import jax.numpy as jnp
from jax.experimental import pallas as pl
from jax.experimental.pallas import tpu as pltpu


# ----------------------------- task configuration ----------------------------
TASK_CONFIGS = {
    "sentiment": {"type": "classification", "num_classes": 8},
    "score": {"type": "regression"},
}

LN_EPS = 1e-5   # nn.LayerNorm default
LANE = 128


def _round_up(x, m):
    return (x + m - 1) // m * m


# --------------------------------- kernel ------------------------------------
def _multitask_kernel(x_ref, w1_ref, b1_ref, gamma_ref, beta_ref, lmask_ref,
                      wh_ref, bh_ref, rmask_ref, out_ref, *, inv_hidden):
    """Fused: shared Linear -> LayerNorm -> ReLU -> (Dropout=id) -> fused heads."""
    # shared_layer[0]: Linear(input_dim, hidden)   (hidden zero-padded to 128*k)
    h = jnp.dot(x_ref[...], w1_ref[...],
                preferred_element_type=jnp.float32) + b1_ref[...]

    # shared_layer[1]: LayerNorm(hidden).  Padded lanes of h are exactly 0, so
    # the mean needs no mask; the variance uses the resident lane mask so that
    # padding never changes the statistics (two-pass, matches the reference).
    mean = jnp.sum(h, axis=-1, keepdims=True) * inv_hidden
    diff = (h - mean) * lmask_ref[...]
    var = jnp.sum(diff * diff, axis=-1, keepdims=True) * inv_hidden
    h = (h - mean) * jax.lax.rsqrt(var + LN_EPS)
    # gamma/beta are zero-padded, so padded lanes become exactly 0 again here.
    h = h * gamma_ref[...] + beta_ref[...]

    # shared_layer[2]: ReLU ; shared_layer[3]: Dropout(0.1) == identity (eval)
    h = jnp.maximum(h, 0.0)

    # Fused task heads: one lane-dense matmul, ReLU only on regression columns.
    o = jnp.dot(h.astype(wh_ref.dtype), wh_ref[...],
                preferred_element_type=jnp.float32) + bh_ref[...]
    o = jnp.where(rmask_ref[...] > 0.0, jnp.maximum(o, 0.0), o)
    out_ref[...] = o.astype(out_ref.dtype)


# ------------------------------ parameter packing ------------------------------
def pack_params(params, task_configs, *, compute_dtype=jnp.bfloat16):
    """Pad / fuse module parameters once; reuse across forward calls."""
    d_in, hidden = params["w1"].shape
    hp = _round_up(hidden, LANE)

    task_names = list(task_configs.keys())
    out_dims = [task_configs[t]["num_classes"]
                if task_configs[t]["type"] == "classification" else 1
                for t in task_names]
    total_out = sum(out_dims)
    op = _round_up(total_out, LANE)

    f32 = jnp.float32
    cd = compute_dtype
    w1_p = jnp.zeros((d_in, hp), cd).at[:, :hidden].set(params["w1"].astype(cd))
    b1_p = jnp.zeros((1, hp), f32).at[:, :hidden].set(params["b1"].astype(f32))
    g_p = jnp.zeros((1, hp), f32).at[:, :hidden].set(params["ln_gamma"].astype(f32))
    be_p = jnp.zeros((1, hp), f32).at[:, :hidden].set(params["ln_beta"].astype(f32))

    wh = jnp.concatenate([params["head_w"][t].astype(cd) for t in task_names], axis=1)
    bh = jnp.concatenate([params["head_b"][t].astype(f32) for t in task_names], axis=1)
    wh_p = jnp.zeros((hp, op), cd).at[:hidden, :total_out].set(wh)
    bh_p = jnp.zeros((1, op), f32).at[:, :total_out].set(bh)

    lane_mask = np.zeros((1, hp), np.float32)
    lane_mask[0, :hidden] = 1.0

    relu_mask = np.zeros((1, op), np.float32)
    offsets = []
    off = 0
    for t, od in zip(task_names, out_dims):
        offsets.append(off)
        if task_configs[t]["type"] == "regression":
            relu_mask[0, off:off + od] = 1.0
        off += od

    return {
        "arrays": (w1_p, b1_p, g_p, be_p, jnp.asarray(lane_mask),
                   wh_p, bh_p, jnp.asarray(relu_mask)),
        "d_in": d_in, "hidden": hidden, "hp": hp, "op": op,
        "task_names": task_names, "out_dims": out_dims, "offsets": offsets,
        "compute_dtype": cd,
    }


@functools.lru_cache(maxsize=1)
def _vmem_cap_bytes():
    # ~75% of physical VMEM: ~48 MiB on v7x (64 MiB), ~96 MiB on v5e/v6e (128 MiB).
    phys = 128 << 20
    try:
        info = pltpu.get_tpu_info()
        phys = int(getattr(info, "vmem_capacity_bytes", phys) or phys)
    except Exception:
        pass
    return (phys * 3) // 4


# -------------------------------- forward -------------------------------------
def multitask_head_forward(x, packed, *, batch_tile=1024, out_dtype=jnp.float32):
    """Run the fused Pallas kernel. Returns dict task -> output array."""
    batch, d_in = x.shape
    assert d_in == packed["d_in"], (d_in, packed["d_in"])
    hidden, hp, op = packed["hidden"], packed["hp"], packed["op"]
    cd = packed["compute_dtype"]
    x = x.astype(cd)                         # bf16 matmul operand by default

    x_bpe = jnp.dtype(cd).itemsize
    out_bpe = jnp.dtype(out_dtype).itemsize
    param_bytes = (d_in * hp + hp * op) * x_bpe + (4 * hp + 2 * op) * 4
    vmem_cap = _vmem_cap_bytes()

    def tile_bytes(t):
        # double-buffered x / out tiles + f32 working set (h and LN temporaries)
        return 2 * t * d_in * x_bpe + 2 * t * op * out_bpe + 3 * t * hp * 4

    # ---- batch tile: >=2 grid steps on larger batches (v7x megacore), no
    #      host-side jnp.pad of x — last block may be partial (Pallas masks it).
    if batch <= 8:
        tb = batch
    else:
        tb = min(batch_tile, _round_up(-(-batch // 2), 8))
        tb = max(8, (tb // 8) * 8)
        while tb > 8 and param_bytes + tile_bytes(tb) > vmem_cap - (4 << 20):
            tb = max(8, (tb // 2 // 8) * 8)
    grid_b = pl.cdiv(batch, tb)

    vmem_limit = int(min(vmem_cap,
                         max(16 << 20, 2 * param_bytes + tile_bytes(tb) + (8 << 20))))

    cost = pl.CostEstimate(
        flops=2 * batch * (d_in * hp + hp * op) + 10 * batch * hp,
        transcendentals=batch,                       # one rsqrt per row
        bytes_accessed=batch * d_in * x_bpe + batch * op * out_bpe + param_bytes,
    )

    kernel = functools.partial(_multitask_kernel, inv_hidden=float(1.0 / hidden))
    const = lambda i: (0, 0)

    def build(single_buffer_params):
        # Constant-index_map params never change across grid steps; request a
        # single VMEM buffer for them (frees param_bytes of VMEM). Fall back to
        # the default double-buffered specs if Buffered(1) is rejected.
        pm = {"pipeline_mode": pl.Buffered(1)} if single_buffer_params else {}
        in_specs = [
            pl.BlockSpec((tb, d_in), lambda i: (i, 0)),       # x: batch-tiled
            pl.BlockSpec((d_in, hp), const, **pm),            # w1 (resident)
            pl.BlockSpec((1, hp), const, **pm),               # b1
            pl.BlockSpec((1, hp), const, **pm),               # ln gamma
            pl.BlockSpec((1, hp), const, **pm),               # ln beta
            pl.BlockSpec((1, hp), const, **pm),               # LN lane mask
            pl.BlockSpec((hp, op), const, **pm),              # fused head weight
            pl.BlockSpec((1, op), const, **pm),               # fused head bias
            pl.BlockSpec((1, op), const, **pm),               # regression ReLU mask
        ]
        return pl.pallas_call(
            kernel,
            out_shape=jax.ShapeDtypeStruct((batch, op), out_dtype),
            grid=(grid_b,),
            in_specs=in_specs,
            out_specs=pl.BlockSpec((tb, op), lambda i: (i, 0)),
            compiler_params=pltpu.CompilerParams(
                dimension_semantics=("parallel",),
                vmem_limit_bytes=vmem_limit,
            ),
            cost_estimate=cost,
        )

    args = (x,) + packed["arrays"]
    try:
        out_slab = jax.block_until_ready(build(True)(*args))
    except Exception:
        out_slab = build(False)(*args)

    outs = {}
    for t, od, o0 in zip(packed["task_names"], packed["out_dims"], packed["offsets"]):
        outs[t] = out_slab[:, o0:o0 + od]
    return outs


# ------------------------------ parameter init --------------------------------
def init_params(key, input_dim, task_configs):
    hidden = input_dim // 2
    keys = jax.random.split(key, 4 + 2 * len(task_configs))

    params = {
        # shared Linear stored as (in, out); biases kept 2D (1, out) for TPU layout
        "w1": jax.random.normal(keys[0], (input_dim, hidden), jnp.float32) * 0.05,
        "b1": jax.random.normal(keys[1], (1, hidden), jnp.float32) * 0.01,
        "ln_gamma": jnp.ones((1, hidden), jnp.float32),
        "ln_beta": jnp.zeros((1, hidden), jnp.float32),
        "head_w": {},
        "head_b": {},
    }
    ki = 4
    for t, cfg in task_configs.items():
        out_dim = cfg["num_classes"] if cfg["type"] == "classification" else 1
        params["head_w"][t] = (
            jax.random.normal(keys[ki], (hidden, out_dim), jnp.float32) * 0.05)
        params["head_b"][t] = (
            jax.random.normal(keys[ki + 1], (1, out_dim), jnp.float32) * 0.01)
        ki += 2
    # task_weights exists in the module but is only used in compute_losses,
    # not in forward(); kept here for shape fidelity.
    params["task_weights"] = jnp.ones((len(task_configs),), jnp.float32)
    return params


# ------------------------------ pure-JAX reference ----------------------------
def reference_forward(x, params, task_configs):
    h = x @ params["w1"] + params["b1"]
    mean = jnp.mean(h, axis=-1, keepdims=True)
    var = jnp.mean((h - mean) ** 2, axis=-1, keepdims=True)
    h = (h - mean) / jnp.sqrt(var + LN_EPS)
    h = h * params["ln_gamma"] + params["ln_beta"]
    h = jnp.maximum(h, 0.0)
    outs = {}
    for t, cfg in task_configs.items():
        o = h @ params["head_w"][t] + params["head_b"][t]
        if cfg["type"] == "regression":
            o = jnp.maximum(o, 0.0)
        outs[t] = o
    return outs


# ---------------------------------- main --------------------------------------
if __name__ == "__main__":
    key = jax.random.PRNGKey(0)
    k_x, k_p = jax.random.split(key)

    batch, input_dim = 2, 32   # hidden = 16
    x = jax.random.normal(k_x, (batch, input_dim), jnp.float32)
    params = init_params(k_p, input_dim, TASK_CONFIGS)
    ref = reference_forward(x, params, TASK_CONFIGS)

    # exact-dtype path (f32 matmul operands) — tight check against the reference
    packed_f32 = pack_params(params, TASK_CONFIGS, compute_dtype=jnp.float32)
    outs_f32 = multitask_head_forward(x, packed_f32)
    outs_f32 = jax.tree_util.tree_map(jax.block_until_ready, outs_f32)
    for t in TASK_CONFIGS:
        assert outs_f32[t].shape == ref[t].shape, (t, outs_f32[t].shape, ref[t].shape)
        assert jnp.allclose(outs_f32[t], ref[t], atol=1e-5, rtol=1e-5), t

    # default performance path (bf16 matmul operands, f32 accumulation)
    packed_bf16 = pack_params(params, TASK_CONFIGS)   # bf16 by default
    outs_bf16 = multitask_head_forward(x, packed_bf16)
    outs_bf16 = jax.tree_util.tree_map(jax.block_until_ready, outs_bf16)
    for t in TASK_CONFIGS:
        assert outs_bf16[t].shape == ref[t].shape, (t, outs_bf16[t].shape)
        assert jnp.allclose(outs_bf16[t], ref[t], atol=5e-2, rtol=5e-2), t

    print("KERNEL_OK")
</pallas_src>

<mosaic_0001>
module attributes {stable_mosaic.version = 11 : i64} {
  func.func @_multitask_kernel(%arg0: i32, %arg1: memref<2x32xf32, #tpu.memory_space<vmem>>, %arg2: memref<32x128xf32, #tpu.memory_space<vmem>>, %arg3: memref<1x128xf32, #tpu.memory_space<vmem>>, %arg4: memref<1x128xf32, #tpu.memory_space<vmem>>, %arg5: memref<1x128xf32, #tpu.memory_space<vmem>>, %arg6: memref<1x128xf32, #tpu.memory_space<vmem>>, %arg7: memref<128x128xf32, #tpu.memory_space<vmem>>, %arg8: memref<1x128xf32, #tpu.memory_space<vmem>>, %arg9: memref<1x128xf32, #tpu.memory_space<vmem>>, %arg10: memref<2x128xf32, #tpu.memory_space<vmem>>) attributes {dimension_semantics = [#tpu.dimension_semantics<parallel>], iteration_bounds = array<i64: 1>, scalar_prefetch = 0 : i64, scratch_operands = 0 : i64, tpu.core_type = #tpu.core_type<tc>, window_params = [{transform_indices = @transform_0, window_bounds = array<i64: 2, 32>}, {pipeline_mode = #tpu.pipeline_mode<synchronous>, transform_indices = @transform_1, window_bounds = array<i64: 32, 128>}, {pipeline_mode = #tpu.pipeline_mode<synchronous>, transform_indices = @transform_2, window_bounds = array<i64: 1, 128>}, {pipeline_mode = #tpu.pipeline_mode<synchronous>, transform_indices = @transform_3, window_bounds = array<i64: 1, 128>}, {pipeline_mode = #tpu.pipeline_mode<synchronous>, transform_indices = @transform_4, window_bounds = array<i64: 1, 128>}, {pipeline_mode = #tpu.pipeline_mode<synchronous>, transform_indices = @transform_5, window_bounds = array<i64: 1, 128>}, {pipeline_mode = #tpu.pipeline_mode<synchronous>, transform_indices = @transform_6, window_bounds = array<i64: 128, 128>}, {pipeline_mode = #tpu.pipeline_mode<synchronous>, transform_indices = @transform_7, window_bounds = array<i64: 1, 128>}, {pipeline_mode = #tpu.pipeline_mode<synchronous>, transform_indices = @transform_8, window_bounds = array<i64: 1, 128>}, {transform_indices = @transform_9, window_bounds = array<i64: 2, 128>}]} {
    %c0 = arith.constant 0 : index
    %c0_0 = arith.constant 0 : index
    %0 = vector.load %arg1[%c0, %c0_0] : memref<2x32xf32, #tpu.memory_space<vmem>>, vector<2x32xf32>
    %c0_1 = arith.constant 0 : index
    %c0_2 = arith.constant 0 : index
    %1 = vector.load %arg2[%c0_1, %c0_2] : memref<32x128xf32, #tpu.memory_space<vmem>>, vector<32x128xf32>
    %cst = arith.constant dense<0.000000e+00> : vector<2x128xf32>
    %2 = tpu.matmul %0, %1, %cst {dimension_numbers = #tpu.dot_dimension_numbers<[1], [0], [0], [1], [0, 0, 1, 1], [], []>} : vector<2x32xf32>, vector<32x128xf32>, vector<2x128xf32> -> vector<2x128xf32>
    %c0_3 = arith.constant 0 : index
    %c0_4 = arith.constant 0 : index
    %3 = vector.load %arg3[%c0_3, %c0_4] : memref<1x128xf32, #tpu.memory_space<vmem>>, vector<1x128xf32>
    %4 = vector.broadcast %3 : vector<1x128xf32> to vector<2x128xf32>
    %5 = arith.addf %2, %4 : vector<2x128xf32>
    %cst_5 = arith.constant dense<0.000000e+00> : vector<2xf32>
    %6 = vector.multi_reduction <add>, %5, %cst_5 [1] : vector<2x128xf32> to vector<2xf32>
    %7 = vector.shape_cast %6 : vector<2xf32> to vector<2x1xf32>
    %cst_6 = arith.constant 6.250000e-02 : f32
    %8 = vector.broadcast %cst_6 : f32 to vector<2x1xf32>
    %9 = arith.mulf %7, %8 : vector<2x1xf32>
    %10 = vector.broadcast %9 : vector<2x1xf32> to vector<2x128xf32>
    %11 = arith.subf %5, %10 : vector<2x128xf32>
    %c0_7 = arith.constant 0 : index
    %c0_8 = arith.constant 0 : index
    %12 = vector.load %arg6[%c0_7, %c0_8] : memref<1x128xf32, #tpu.memory_space<vmem>>, vector<1x128xf32>
    %13 = vector.broadcast %12 : vector<1x128xf32> to vector<2x128xf32>
    %14 = arith.mulf %11, %13 : vector<2x128xf32>
    %15 = arith.mulf %14, %14 : vector<2x128xf32>
    %cst_9 = arith.constant dense<0.000000e+00> : vector<2xf32>
    %16 = vector.multi_reduction <add>, %15, %cst_9 [1] : vector<2x128xf32> to vector<2xf32>
    %17 = vector.shape_cast %16 : vector<2xf32> to vector<2x1xf32>
    %cst_10 = arith.constant 6.250000e-02 : f32
    %18 = vector.broadcast %cst_10 : f32 to vector<2x1xf32>
    %19 = arith.mulf %17, %18 : vector<2x1xf32>
    %20 = vector.broadcast %9 : vector<2x1xf32> to vector<2x128xf32>
    %21 = arith.subf %5, %20 : vector<2x128xf32>
    %cst_11 = arith.constant 9.99999974E-6 : f32
    %22 = vector.broadcast %cst_11 : f32 to vector<2x1xf32>
    %23 = arith.addf %19, %22 : vector<2x1xf32>
    %24 = math.rsqrt %23 : vector<2x1xf32>
    %25 = vector.broadcast %24 : vector<2x1xf32> to vector<2x128xf32>
    %26 = arith.mulf %21, %25 : vector<2x128xf32>
    %c0_12 = arith.constant 0 : index
    %c0_13 = arith.constant 0 : index
    %27 = vector.load %arg4[%c0_12, %c0_13] : memref<1x128xf32, #tpu.memory_space<vmem>>, vector<1x128xf32>
    %28 = vector.broadcast %27 : vector<1x128xf32> to vector<2x128xf32>
    %29 = arith.mulf %26, %28 : vector<2x128xf32>
    %c0_14 = arith.constant 0 : index
    %c0_15 = arith.constant 0 : index
    %30 = vector.load %arg5[%c0_14, %c0_15] : memref<1x128xf32, #tpu.memory_space<vmem>>, vector<1x128xf32>
    %31 = vector.broadcast %30 : vector<1x128xf32> to vector<2x128xf32>
    %32 = arith.addf %29, %31 : vector<2x128xf32>
    %cst_16 = arith.constant 0.000000e+00 : f32
    %33 = vector.broadcast %cst_16 : f32 to vector<2x128xf32>
    %34 = arith.maximumf %32, %33 : vector<2x128xf32>
    %c0_17 = arith.constant 0 : index
    %c0_18 = arith.constant 0 : index
    %35 = vector.load %arg7[%c0_17, %c0_18] : memref<128x128xf32, #tpu.memory_space<vmem>>, vector<128x128xf32>
    %cst_19 = arith.constant dense<0.000000e+00> : vector<2x128xf32>
    %36 = tpu.matmul %34, %35, %cst_19 {dimension_numbers = #tpu.dot_dimension_numbers<[1], [0], [0], [1], [0, 0, 1, 1], [], []>} : vector<2x128xf32>, vector<128x128xf32>, vector<2x128xf32> -> vector<2x128xf32>
    %c0_20 = arith.constant 0 : index
    %c0_21 = arith.constant 0 : index
    %37 = vector.load %arg8[%c0_20, %c0_21] : memref<1x128xf32, #tpu.memory_space<vmem>>, vector<1x128xf32>
    %38 = vector.broadcast %37 : vector<1x128xf32> to vector<2x128xf32>
    %39 = arith.addf %36, %38 : vector<2x128xf32>
    %c0_22 = arith.constant 0 : index
    %c0_23 = arith.constant 0 : index
    %40 = vector.load %arg9[%c0_22, %c0_23] : memref<1x128xf32, #tpu.memory_space<vmem>>, vector<1x128xf32>
    %cst_24 = arith.constant 0.000000e+00 : f32
    %41 = vector.broadcast %cst_24 : f32 to vector<1x128xf32>
    %42 = arith.cmpf ogt, %40, %41 : vector<1x128xf32>
    %cst_25 = arith.constant 0.000000e+00 : f32
    %43 = vector.broadcast %cst_25 : f32 to vector<2x128xf32>
    %44 = arith.maximumf %39, %43 : vector<2x128xf32>
    %45 = vector.shape_cast %42 : vector<1x128xi1> to vector<1x128xi1>
    %46 = vector.broadcast %45 : vector<1x128xi1> to vector<2x128xi1>
    %47 = arith.select %46, %44, %39 : vector<2x128xi1>, vector<2x128xf32>
    %c0_26 = arith.constant 0 : index
    %c0_27 = arith.constant 0 : index
    %48 = vector.load %arg10[%c0_26, %c0_27] : memref<2x128xf32, #tpu.memory_space<vmem>>, vector<2x128xf32>
    tpu.vector_store %arg10[%c0_26, %c0_27], %47 {strides = array<i32>} : memref<2x128xf32, #tpu.memory_space<vmem>>, vector<2x128xf32>,
    return
  }
  func.func @transform_0(%arg0: i32) -> (i32, i32) {
    %c0_i32 = arith.constant 0 : i32
    %c0_i32_0 = arith.constant 0 : i32
    return %arg0, %c0_i32 : i32, i32
  }
  func.func @transform_1(%arg0: i32) -> (i32, i32) {
    %c0_i32 = arith.constant 0 : i32
    %c0_i32_0 = arith.constant 0 : i32
    %c0_i32_1 = arith.constant 0 : i32
    return %c0_i32, %c0_i32_0 : i32, i32
  }
  func.func @transform_2(%arg0: i32) -> (i32, i32) {
    %c0_i32 = arith.constant 0 : i32
    %c0_i32_0 = arith.constant 0 : i32
    %c0_i32_1 = arith.constant 0 : i32
    return %c0_i32, %c0_i32_0 : i32, i32
  }
  func.func @transform_3(%arg0: i32) -> (i32, i32) {
    %c0_i32 = arith.constant 0 : i32
    %c0_i32_0 = arith.constant 0 : i32
    %c0_i32_1 = arith.constant 0 : i32
    return %c0_i32, %c0_i32_0 : i32, i32
  }
  func.func @transform_4(%arg0: i32) -> (i32, i32) {
    %c0_i32 = arith.constant 0 : i32
    %c0_i32_0 = arith.constant 0 : i32
    %c0_i32_1 = arith.constant 0 : i32
    return %c0_i32, %c0_i32_0 : i32, i32
  }
  func.func @transform_5(%arg0: i32) -> (i32, i32) {
    %c0_i32 = arith.constant 0 : i32
    %c0_i32_0 = arith.constant 0 : i32
    %c0_i32_1 = arith.constant 0 : i32
    return %c0_i32, %c0_i32_0 : i32, i32
  }
  func.func @transform_6(%arg0: i32) -> (i32, i32) {
    %c0_i32 = arith.constant 0 : i32
    %c0_i32_0 = arith.constant 0 : i32
    %c0_i32_1 = arith.constant 0 : i32
    return %c0_i32, %c0_i32_0 : i32, i32
  }
  func.func @transform_7(%arg0: i32) -> (i32, i32) {
    %c0_i32 = arith.constant 0 : i32
    %c0_i32_0 = arith.constant 0 : i32
    %c0_i32_1 = arith.constant 0 : i32
    return %c0_i32, %c0_i32_0 : i32, i32
  }
  func.func @transform_8(%arg0: i32) -> (i32, i32) {
    %c0_i32 = arith.constant 0 : i32
    %c0_i32_0 = arith.constant 0 : i32
    %c0_i32_1 = arith.constant 0 : i32
    return %c0_i32, %c0_i32_0 : i32, i32
  }
  func.func @transform_9(%arg0: i32) -> (i32, i32) {
    %c0_i32 = arith.constant 0 : i32
    %c0_i32_0 = arith.constant 0 : i32
    return %arg0, %c0_i32 : i32, i32
  }
}

module attributes {stable_mosaic.version = 11 : i64} {
  func.func @_multitask_kernel(%arg0: i32, %arg1: memref<2x32xf32, #tpu.memory_space<vmem>>, %arg2: memref<32x128xf32, #tpu.memory_space<vmem>>, %arg3: memref<1x128xf32, #tpu.memory_space<vmem>>, %arg4: memref<1x128xf32, #tpu.memory_space<vmem>>, %arg5: memref<1x128xf32, #tpu.memory_space<vmem>>, %arg6: memref<1x128xf32, #tpu.memory_space<vmem>>, %arg7: memref<128x128xf32, #tpu.memory_space<vmem>>, %arg8: memref<1x128xf32, #tpu.memory_space<vmem>>, %arg9: memref<1x128xf32, #tpu.memory_space<vmem>>, %arg10: memref<2x128xf32, #tpu.memory_space<vmem>>) attributes {dimension_semantics = [#tpu.dimension_semantics<parallel>], iteration_bounds = array<i64: 1>, scalar_prefetch = 0 : i64, scratch_operands = 0 : i64, tpu.core_type = #tpu.core_type<tc>, window_params = [{transform_indices = @transform_0, window_bounds = array<i64: 2, 32>}, {pipeline_mode = #tpu.pipeline_mode<synchronous>, transform_indices = @transform_1, window_bounds = array<i64: 32, 128>}, {pipeline_mode = #tpu.pipeline_mode<synchronous>, transform_indices = @transform_2, window_bounds = array<i64: 1, 128>}, {pipeline_mode = #tpu.pipeline_mode<synchronous>, transform_indices = @transform_3, window_bounds = array<i64: 1, 128>}, {pipeline_mode = #tpu.pipeline_mode<synchronous>, transform_indices = @transform_4, window_bounds = array<i64: 1, 128>}, {pipeline_mode = #tpu.pipeline_mode<synchronous>, transform_indices = @transform_5, window_bounds = array<i64: 1, 128>}, {pipeline_mode = #tpu.pipeline_mode<synchronous>, transform_indices = @transform_6, window_bounds = array<i64: 128, 128>}, {pipeline_mode = #tpu.pipeline_mode<synchronous>, transform_indices = @transform_7, window_bounds = array<i64: 1, 128>}, {pipeline_mode = #tpu.pipeline_mode<synchronous>, transform_indices = @transform_8, window_bounds = array<i64: 1, 128>}, {transform_indices = @transform_9, window_bounds = array<i64: 2, 128>}]} {
    %c0 = arith.constant 0 : index
    %c0_0 = arith.constant 0 : index
    %0 = vector.load %arg1[%c0, %c0_0] : memref<2x32xf32, #tpu.memory_space<vmem>>, vector<2x32xf32>
    %c0_1 = arith.constant 0 : index
    %c0_2 = arith.constant 0 : index
    %1 = vector.load %arg2[%c0_1, %c0_2] : memref<32x128xf32, #tpu.memory_space<vmem>>, vector<32x128xf32>
    %cst = arith.constant dense<0.000000e+00> : vector<2x128xf32>
    %2 = tpu.matmul %0, %1, %cst {dimension_numbers = #tpu.dot_dimension_numbers<[1], [0], [0], [1], [0, 0, 1, 1], [], []>} : vector<2x32xf32>, vector<32x128xf32>, vector<2x128xf32> -> vector<2x128xf32>
    %c0_3 = arith.constant 0 : index
    %c0_4 = arith.constant 0 : index
    %3 = vector.load %arg3[%c0_3, %c0_4] : memref<1x128xf32, #tpu.memory_space<vmem>>, vector<1x128xf32>
    %4 = vector.broadcast %3 : vector<1x128xf32> to vector<2x128xf32>
    %5 = arith.addf %2, %4 : vector<2x128xf32>
    %cst_5 = arith.constant dense<0.000000e+00> : vector<2xf32>
    %6 = vector.multi_reduction <add>, %5, %cst_5 [1] : vector<2x128xf32> to vector<2xf32>
    %7 = vector.shape_cast %6 : vector<2xf32> to vector<2x1xf32>
    %cst_6 = arith.constant 6.250000e-02 : f32
    %8 = vector.broadcast %cst_6 : f32 to vector<2x1xf32>
    %9 = arith.mulf %7, %8 : vector<2x1xf32>
    %10 = vector.broadcast %9 : vector<2x1xf32> to vector<2x128xf32>
    %11 = arith.subf %5, %10 : vector<2x128xf32>
    %c0_7 = arith.constant 0 : index
    %c0_8 = arith.constant 0 : index
    %12 = vector.load %arg6[%c0_7, %c0_8] : memref<1x128xf32, #tpu.memory_space<vmem>>, vector<1x128xf32>
    %13 = vector.broadcast %12 : vector<1x128xf32> to vector<2x128xf32>
    %14 = arith.mulf %11, %13 : vector<2x128xf32>
    %15 = arith.mulf %14, %14 : vector<2x128xf32>
    %cst_9 = arith.constant dense<0.000000e+00> : vector<2xf32>
    %16 = vector.multi_reduction <add>, %15, %cst_9 [1] : vector<2x128xf32> to vector<2xf32>
    %17 = vector.shape_cast %16 : vector<2xf32> to vector<2x1xf32>
    %cst_10 = arith.constant 6.250000e-02 : f32
    %18 = vector.broadcast %cst_10 : f32 to vector<2x1xf32>
    %19 = arith.mulf %17, %18 : vector<2x1xf32>
    %20 = vector.broadcast %9 : vector<2x1xf32> to vector<2x128xf32>
    %21 = arith.subf %5, %20 : vector<2x128xf32>
    %cst_11 = arith.constant 9.99999974E-6 : f32
    %22 = vector.broadcast %cst_11 : f32 to vector<2x1xf32>
    %23 = arith.addf %19, %22 : vector<2x1xf32>
    %24 = math.rsqrt %23 : vector<2x1xf32>
    %25 = vector.broadcast %24 : vector<2x1xf32> to vector<2x128xf32>
    %26 = arith.mulf %21, %25 : vector<2x128xf32>
    %c0_12 = arith.constant 0 : index
    %c0_13 = arith.constant 0 : index
    %27 = vector.load %arg4[%c0_12, %c0_13] : memref<1x128xf32, #tpu.memory_space<vmem>>, vector<1x128xf32>
    %28 = vector.broadcast %27 : vector<1x128xf32> to vector<2x128xf32>
    %29 = arith.mulf %26, %28 : vector<2x128xf32>
    %c0_14 = arith.constant 0 : index
    %c0_15 = arith.constant 0 : index
    %30 = vector.load %arg5[%c0_14, %c0_15] : memref<1x128xf32, #tpu.memory_space<vmem>>, vector<1x128xf32>
    %31 = vector.broadcast %30 : vector<1x128xf32> to vector<2x128xf32>
    %32 = arith.addf %29, %31 : vector<2x128xf32>
    %cst_16 = arith.constant 0.000000e+00 : f32
    %33 = vector.broadcast %cst_16 : f32 to vector<2x128xf32>
    %34 = arith.maximumf %32, %33 : vector<2x128xf32>
    %c0_17 = arith.constant 0 : index
    %c0_18 = arith.constant 0 : index
    %35 = vector.load %arg7[%c0_17, %c0_18] : memref<128x128xf32, #tpu.memory_space<vmem>>, vector<128x128xf32>
    %cst_19 = arith.constant dense<0.000000e+00> : vector<2x128xf32>
    %36 = tpu.matmul %34, %35, %cst_19 {dimension_numbers = #tpu.dot_dimension_numbers<[1], [0], [0], [1], [0, 0, 1, 1], [], []>} : vector<2x128xf32>, vector<128x128xf32>, vector<2x128xf32> -> vector<2x128xf32>
    %c0_20 = arith.constant 0 : index
    %c0_21 = arith.constant 0 : index
    %37 = vector.load %arg8[%c0_20, %c0_21] : memref<1x128xf32, #tpu.memory_space<vmem>>, vector<1x128xf32>
    %38 = vector.broadcast %37 : vector<1x128xf32> to vector<2x128xf32>
    %39 = arith.addf %36, %38 : vector<2x128xf32>
    %c0_22 = arith.constant 0 : index
    %c0_23 = arith.constant 0 : index
    %40 = vector.load %arg9[%c0_22, %c0_23] : memref<1x128xf32, #tpu.memory_space<vmem>>, vector<1x128xf32>
    %cst_24 = arith.constant 0.000000e+00 : f32
    %41 = vector.broadcast %cst_24 : f32 to vector<1x128xf32>
    %42 = arith.cmpf ogt, %40, %41 : vector<1x128xf32>
    %cst_25 = arith.constant 0.000000e+00 : f32
    %43 = vector.broadcast %cst_25 : f32 to vector<2x128xf32>
    %44 = arith.maximumf %39, %43 : vector<2x128xf32>
    %45 = vector.shape_cast %42 : vector<1x128xi1> to vector<1x128xi1>
    %46 = vector.broadcast %45 : vector<1x128xi1> to vector<2x128xi1>
    %47 = arith.select %46, %44, %39 : vector<2x128xi1>, vector<2x128xf32>
    %c0_26 = arith.constant 0 : index
    %c0_27 = arith.constant 0 : index
    %48 = vector.load %arg10[%c0_26, %c0_27] : memref<2x128xf32, #tpu.memory_space<vmem>>, vector<2x128xf32>
    tpu.vector_store %arg10[%c0_26, %c0_27], %47 {strides = array<i32>} : memref<2x128xf32, #tpu.memory_space<vmem>>, vector<2x128xf32>,
    return
  }
  func.func @transform_0(%arg0: i32) -> (i32, i32) {
    %c0_i32 = arith.constant 0 : i32
    %c0_i32_0 = arith.constant 0 : i32
    return %arg0, %c0_i32 : i32, i32
  }
  func.func @transform_1(%arg0: i32) -> (i32, i32) {
    %c0_i32 = arith.constant 0 : i32
    %c0_i32_0 = arith.constant 0 : i32
    %c0_i32_1 = arith.constant 0 : i32
    return %c0_i32, %c0_i32_0 : i32, i32
  }
  func.func @transform_2(%arg0: i32) -> (i32, i32) {
    %c0_i32 = arith.constant 0 : i32
    %c0_i32_0 = arith.constant 0 : i32
    %c0_i32_1 = arith.constant 0 : i32
    return %c0_i32, %c0_i32_0 : i32, i32
  }
  func.func @transform_3(%arg0: i32) -> (i32, i32) {
    %c0_i32 = arith.constant 0 : i32
    %c0_i32_0 = arith.constant 0 : i32
    %c0_i32_1 = arith.constant 0 : i32
    return %c0_i32, %c0_i32_0 : i32, i32
  }
  func.func @transform_4(%arg0: i32) -> (i32, i32) {
    %c0_i32 = arith.constant 0 : i32
    %c0_i32_0 = arith.constant 0 : i32
    %c0_i32_1 = arith.constant 0 : i32
    return %c0_i32, %c0_i32_0 : i32, i32
  }
  func.func @transform_5(%arg0: i32) -> (i32, i32) {
    %c0_i32 = arith.constant 0 : i32
    %c0_i32_0 = arith.constant 0 : i32
    %c0_i32_1 = arith.constant 0 : i32
    return %c0_i32, %c0_i32_0 : i32, i32
  }
  func.func @transform_6(%arg0: i32) -> (i32, i32) {
    %c0_i32 = arith.constant 0 : i32
    %c0_i32_0 = arith.constant 0 : i32
    %c0_i32_1 = arith.constant 0 : i32
    return %c0_i32, %c0_i32_0 : i32, i32
  }
  func.func @transform_7(%arg0: i32) -> (i32, i32) {
    %c0_i32 = arith.constant 0 : i32
    %c0_i32_0 = arith.constant 0 : i32
    %c0_i32_1 = arith.constant 0 : i32
    return %c0_i32, %c0_i32_0 : i32, i32
  }
  func.func @transform_8(%arg0: i32) -> (i32, i32) {
    %c0_i32 = arith.constant 0 : i32
    %c0_i32_0 = arith.constant 0 : i32
    %c0_i32_1 = arith.constant 0 : i32
    return %c0_i32, %c0_i32_0 : i32, i32
  }
  func.func @transform_9(%arg0: i32) -> (i32, i32) {
    %c0_i32 = arith.constant 0 : i32
    %c0_i32_0 = arith.constant 0 : i32
    return %arg0, %c0_i32 : i32, i32
  }
}

</mosaic_0001>

<llo_original>
// kernel: tpu_custom_call.1
$region0: #{tpu_custom_call.1}
  #allocation0 [shape = 'u32[]', space=smem, size = 0x4, offset = 0x4, fixed_abs, tag = 'smem constant byte address 0x4 - core index']
  #allocation1 [shape = 'u32[144,128]{1,0:T(1,128)}', space=vmem, size = 0x12000, scoped, tag = 'internal scratch']
  %s0 = inlined_call_operand.hbm [shape: f32[2,32], index: 0, kind: input, shape index: {}]
  %s1 = inlined_call_operand.hbm [shape: f32[32,128], index: 1, kind: input, shape index: {}]
  %s2 = inlined_call_operand.vmem [shape: f32[1,128], index: 2, kind: input, shape index: {}]
  %s3 = inlined_call_operand.vmem [shape: f32[1,128], index: 3, kind: input, shape index: {}]
  %s4 = inlined_call_operand.vmem [shape: f32[1,128], index: 4, kind: input, shape index: {}]
  %s5 = inlined_call_operand.vmem [shape: f32[1,128], index: 5, kind: input, shape index: {}]
  %s6 = inlined_call_operand.hbm [shape: f32[128,128], index: 6, kind: input, shape index: {}]
  %s7 = inlined_call_operand.vmem [shape: f32[1,128], index: 7, kind: input, shape index: {}]
  %s8 = inlined_call_operand.vmem [shape: f32[1,128], index: 8, kind: input, shape index: {}]
  %s9 = inlined_call_operand.hbm [shape: f32[2,128], index: 9, kind: output, shape index: {}]
  %s10 = sld [smem:[#allocation0]]
  $region58: #{tpu_custom_call.1} parent=0
    _
  %s12 = ssub.s32 1, %s10
  %s13 = scalar_select 0, %s12, %s10
  $region1: #{tpu_custom_call.1} parent=0
    #allocation2 [shape = 'u8[1024]{0}', space=vmem, size = 0x400, scoped, tag = 'input window, operand 0, single buffered']
    #allocation3 [shape = 's32[1]{0}', space=sflag, size = 0x4, scoped, tag = 'scoped memory for tpu_custom_call.1']
    #allocation4 [shape = 's32[1]{0}', space=sflag, size = 0x4, scoped, tag = 'scoped memory for tpu_custom_call.1']
    #allocation5 [shape = 'u8[16384]{0}', space=vmem, size = 0x4000, scoped, tag = 'input window, operand 1, single buffered']
    #allocation6 [shape = 's32[1]{0}', space=sflag, size = 0x4, scoped, tag = 'scoped memory for tpu_custom_call.1']
    #allocation7 [shape = 'u8[65536]{0}', space=vmem, size = 0x10000, scoped, tag = 'input window, operand 6, single buffered']
    #allocation8 [shape = 'u8[1024]{0}', space=vmem, size = 0x400, scoped, tag = 'output window, operand 0, single buffered']
    %14 = vsyncpa [#allocation3], 0
    %15 = vsyncpa [#allocation6], 0
    %16 = vsyncpa [#allocation4], 0
    // Predicated region
    $region2: #{tpu_custom_call.1} parent=1 // pred_check
      _
    $region3: #{tpu_custom_call.1} parent=1 // pred_check_branch
      %18 = sbr.rel (0) target = $region5
    $region4: #{tpu_custom_call.1} parent=1 // pred_region
      %s20 = ssub.s32 32, 32
      %21 = vsyncadd [#allocation3], %s20
      %s23 = sshll.u32 [#allocation2], 4
      %s24 = int_to_ptr.vmem [resolvable:$true] %s23
      %26 = dma.hbm_to_vmem [thread:$0]  %s0, 32, %s24, [#allocation3]
    $region5: #{tpu_custom_call.1} parent=1 // pred_fallthru
      _
    // Predicated region
    $region6: #{tpu_custom_call.1} parent=1 // pred_check
      _
    $region7: #{tpu_custom_call.1} parent=1 // pred_check_branch
      %28 = sbr.rel (0) target = $region9
    $region8: #{tpu_custom_call.1} parent=1 // pred_region
      %s30 = ssub.s32 512, 512
      %31 = vsyncadd [#allocation6], %s30
      %s32 = sshll.u32 [#allocation5], 4
      %s33 = int_to_ptr.vmem [resolvable:$true] %s32
      %38 = dma.hbm_to_vmem [thread:$0]  %s1, 512, %s33, [#allocation6], 128, 128, 8
    $region9: #{tpu_custom_call.1} parent=1 // pred_fallthru
      _
    // Predicated region
    $region10: #{tpu_custom_call.1} parent=1 // pred_check
      _
    $region11: #{tpu_custom_call.1} parent=1 // pred_check_branch
      %40 = sbr.rel (0) target = $region13
    $region12: #{tpu_custom_call.1} parent=1 // pred_region
      _
    $region13: #{tpu_custom_call.1} parent=1 // pred_fallthru
      _
    // Predicated region
    $region14: #{tpu_custom_call.1} parent=1 // pred_check
      _
    $region15: #{tpu_custom_call.1} parent=1 // pred_check_branch
      %42 = sbr.rel (0) target = $region17
    $region16: #{tpu_custom_call.1} parent=1 // pred_region
      _
    $region17: #{tpu_custom_call.1} parent=1 // pred_fallthru
      _
    // Predicated region
    $region18: #{tpu_custom_call.1} parent=1 // pred_check
      _
    $region19: #{tpu_custom_call.1} parent=1 // pred_check_branch
      %44 = sbr.rel (0) target = $region21
    $region20: #{tpu_custom_call.1} parent=1 // pred_region
      _
    $region21: #{tpu_custom_call.1} parent=1 // pred_fallthru
      _
    // Predicated region
    $region22: #{tpu_custom_call.1} parent=1 // pred_check
      _
    $region23: #{tpu_custom_call.1} parent=1 // pred_check_branch
      %46 = sbr.rel (0) target = $region25
    $region24: #{tpu_custom_call.1} parent=1 // pred_region
      _
    $region25: #{tpu_custom_call.1} parent=1 // pred_fallthru
      _
    // Predicated region
    $region26: #{tpu_custom_call.1} parent=1 // pred_check
      _
    $region27: #{tpu_custom_call.1} parent=1 // pred_check_branch
      %48 = sbr.rel (0) target = $region29
    $region28: #{tpu_custom_call.1} parent=1 // pred_region
      %s50 = ssub.s32 2048, 2048
      %51 = vsyncadd [#allocation6], %s50
      %s52 = sshll.u32 [#allocation7], 4
      %s53 = int_to_ptr.vmem [resolvable:$true] %s52
      %58 = dma.hbm_to_vmem [thread:$0]  %s6, 2048, %s53, [#allocation6], 128, 128, 8
    $region29: #{tpu_custom_call.1} parent=1 // pred_fallthru
      _
    // Predicated region
    $region30: #{tpu_custom_call.1} parent=1 // pred_check
      _
    $region31: #{tpu_custom_call.1} parent=1 // pred_check_branch
      %60 = sbr.rel (0) target = $region33
    $region32: #{tpu_custom_call.1} parent=1 // pred_region
      _
    $region33: #{tpu_custom_call.1} parent=1 // pred_fallthru
      _
    // Predicated region
    $region34: #{tpu_custom_call.1} parent=1 // pred_check
      _
    $region35: #{tpu_custom_call.1} parent=1 // pred_check_branch
      %62 = sbr.rel (0) target = $region37
    $region36: #{tpu_custom_call.1} parent=1 // pred_region
      _
    $region37: #{tpu_custom_call.1} parent=1 // pred_fallthru
      _
    // Predicated region
    $region38: #{tpu_custom_call.1} parent=1 // pred_check
      _
    $region39: #{tpu_custom_call.1} parent=1 // pred_check_branch
      %64 = sbr.rel (0) target = $region41
    $region40: #{tpu_custom_call.1} parent=1 // pred_region
      %65 = dma.done [#allocation3], 32
    $region41: #{tpu_custom_call.1} parent=1 // pred_fallthru
      _
    // Predicated region
    $region42: #{tpu_custom_call.1} parent=1 // pred_check
      _
    $region43: #{tpu_custom_call.1} parent=1 // pred_check_branch
      %67 = sbr.rel (0) target = $region45
    $region44: #{tpu_custom_call.1} parent=1 // pred_region
      %68 = dma.done [#allocation6], 512
    $region45: #{tpu_custom_call.1} parent=1 // pred_fallthru
      _
    // Predicated region
    $region46: #{tpu_custom_call.1} parent=1 // pred_check
      _
    $region47: #{tpu_custom_call.1} parent=1 // pred_check_branch
      %70 = sbr.rel (0) target = $region49
    $region48: #{tpu_custom_call.1} parent=1 // pred_region
      %71 = dma.done [#allocation6], 2048
    $region49: #{tpu_custom_call.1} parent=1 // pred_fallthru
      _
    %v72 = vld [vmem:[#allocation2] sm:$0x3]
    %v73 = vld [vmem:[#allocation5] sm:$0xff]
    %v74 = vld [vmem:[#allocation5 + $0x8] sm:$0xff]
    %v75 = vld [vmem:[#allocation5 + $0x10] sm:$0xff]
    %v76 = vld [vmem:[#allocation5 + $0x18] sm:$0xff]
    %v77 = vld [vmem:[%s2] sm:$0x1]
    %v79 = vlaneseq
    %v80 = vshrl.u32 %v79, 7
    %v81 = vsub.s32 0, %v80
    %v82 = vrot.slane %v77, %v81
    %vm84 = vcmask 261120
    %v86 = vsel %vm84, %v72, 0
    %88 = vmatprep.subr.mxu0 0.0
    %89 = vmatpush1.msra.mxu0 %v73
    %90 = vmatprep.subr.mxu0 0.0
    %91 = vmatpush1.msra.mxu0 %v74
    %92 = vmatprep.subr.mxu0 0.0
    %93 = vmatpush1.msra.mxu0 %v75
    %94 = vmatprep.subr.mxu0 0.0
    %95 = vmatpush1.msra.mxu0 %v76
    %96 = vmatprep.subr.mxu0 0.0
    %97 = vmatpush1.msra.mxu0 0.0
    %98 = vmatprep.subr.mxu0 0.0
    %99 = vmatpush1.msra.mxu0 0.0
    %100 = vmatprep.subr.mxu0 0.0
    %101 = vmatpush1.msra.mxu0 0.0
    %102 = vmatprep.subr.mxu0 0.0
    %103 = vmatpush1.msra.mxu0 0.0
    %104 = vmatprep.subr.mxu0 0.0
    %105 = vmatpush1.msra.mxu0 0.0
    %106 = vmatprep.subr.mxu0 0.0
    %107 = vmatpush1.msra.mxu0 0.0
    %108 = vmatprep.subr.mxu0 0.0
    %109 = vmatpush1.msra.mxu0 0.0
    %110 = vmatprep.subr.mxu0 0.0
    %111 = vmatpush1.msra.mxu0 0.0
    %112 = vmatprep.subr.mxu0 0.0
    %113 = vmatpush1.msra.mxu0 0.0
    %114 = vmatprep.subr.mxu0 0.0
    %115 = vmatpush1.msra.mxu0 0.0
    %116 = vmatprep.subr.mxu0 0.0
    %117 = vmatpush1.msra.mxu0 0.0
    %118 = vmatprep.subr.mxu0 0.0
    %119 = vmatpush1.msra.mxu0 0.0
    %120 = vmatprep.subr.mxu0 0.0
    %121 = vmatpush1.msra.mxu0 0.0
    %122 = vmatprep.subr.mxu0 0.0
    %123 = vmatpush1.msra.mxu0 0.0
    %124 = vmatprep.subr.mxu0 0.0
    %125 = vmatpush1.msra.mxu0 0.0
    %126 = vmatprep.subr.mxu0 0.0
    %127 = vmatpush1.msra.mxu0 0.0
    %128 = vmatprep.subr.mxu0 0.0
    %129 = vmatpush1.msra.mxu0 0.0
    %130 = vmatprep.subr.mxu0 0.0
    %131 = vmatpush1.msra.mxu0 0.0
    %132 = vmatprep.subr.mxu0 0.0
    %133 = vmatpush1.msra.mxu0 0.0
    %134 = vmatprep.subr.mxu0 0.0
    %135 = vmatpush1.msra.mxu0 0.0
    %136 = vmatprep.subr.mxu0 0.0
    %137 = vmatpush1.msra.mxu0 0.0
    %138 = vmatprep.subr.mxu0 0.0
    %139 = vmatpush1.msra.mxu0 0.0
    %140 = vmatprep.subr.mxu0 0.0
    %141 = vmatpush1.msra.mxu0 0.0
    %142 = vmatprep.subr.mxu0 0.0
    %143 = vmatpush1.msra.mxu0 0.0
    %144 = vmatprep.subr.mxu0 0.0
    %145 = vmatpush1.msra.mxu0 0.0
    %146 = vmatprep.subr.mxu0 0.0
    %147 = vmatpush1.msra.mxu0 0.0
    %148 = vmatprep.subr.mxu0 0.0
    %149 = vmatpush1.msra.mxu0 0.0
    %150 = vmatprep.subr.mxu0 0.0
    %151 = vmatpush1.msra.mxu0 0.0
    %152 = vmatprep.mubr.f32.mxu0 0.0
    %153 = vmatmul.mubr.f32.gmra.mrb[0].mxu0 %v86
    %v154 = vpop.f32.mrb[0].mxu0
    %v155 = vadd.f32 %v82, %v154
    %v156 = vpop.f32.mrb[0].mxu0
    %157 = vdwg.mxu0
    %vm158 = vcmask 1041408
    %v159 = vsel %vm158, %v155, 0.0
    %160 = vadd.xlane.f32.xlu0 %v159
    %v161 = vpop.xlane.xlu0 %160
    %v162 = vmul.f32 %v161, 0.0625
    %v163 = vsub.f32 %v155, %v162
    %v164 = vld [vmem:[%s5] sm:$0x1]
    %v166 = vlaneseq
    %v167 = vshrl.u32 %v166, 7
    %v168 = vsub.s32 0, %v167
    %v169 = vrot.slane %v164, %v168
    %v171 = vmul.f32 %v163, %v169
    %v172 = vmul.f32 %v171, %v171
    %v173 = vsel %vm158, %v172, 0.0
    %174 = vadd.xlane.f32.xlu0 %v173
    %v175 = vpop.xlane.xlu0 %174
    %v176 = vmul.f32 %v175, 0.0625
    %v177 = vadd.f32 %v176, 1e-05
    %v178 = vrsqrt.pop %v177
    %v179 = vmul.f32 %v163, %v178
    %v180 = vld [vmem:[%s3] sm:$0x1]
    %v182 = vlaneseq
    %v183 = vshrl.u32 %v182, 7
    %v184 = vsub.s32 0, %v183
    %v185 = vrot.slane %v180, %v184
    %v187 = vmul.f32 %v179, %v185
    %v188 = vld [vmem:[%s4] sm:$0x1]
    %v190 = vlaneseq
    %v191 = vshrl.u32 %v190, 7
    %v192 = vsub.s32 0, %v191
    %v193 = vrot.slane %v188, %v192
    %v195 = vadd.f32 %v187, %v193
    %v196 = vmax.f32 %v195, 0.0
    %v197 = vld [vmem:[#allocation7] sm:$0xff]
    %v198 = vld [vmem:[#allocation7 + $0x8] sm:$0xff]
    %v199 = vld [vmem:[#allocation7 + $0x10] sm:$0xff]
    %v200 = vld [vmem:[#allocation7 + $0x18] sm:$0xff]
    %v201 = vld [vmem:[#allocation7 + $0x20] sm:$0xff]
    %v202 = vld [vmem:[#allocation7 + $0x28] sm:$0xff]
    %v203 = vld [vmem:[#allocation7 + $0x30] sm:$0xff]
    %v204 = vld [vmem:[#allocation7 + $0x38] sm:$0xff]
    %v205 = vld [vmem:[#allocation7 + $0x40] sm:$0xff]
    %v206 = vld [vmem:[#allocation7 + $0x48] sm:$0xff]
    %v207 = vld [vmem:[#allocation7 + $0x50] sm:$0xff]
    %v208 = vld [vmem:[#allocation7 + $0x58] sm:$0xff]
    %v209 = vld [vmem:[#allocation7 + $0x60] sm:$0xff]
    %v210 = vld [vmem:[#allocation7 + $0x68] sm:$0xff]
    %v211 = vld [vmem:[#allocation7 + $0x70] sm:$0xff]
    %v212 = vld [vmem:[#allocation7 + $0x78] sm:$0xff]
    %v213 = vld [vmem:[%s7] sm:$0x1]
    %v215 = vlaneseq
    %v216 = vshrl.u32 %v215, 7
    %v217 = vsub.s32 0, %v216
    %v218 = vrot.slane %v213, %v217
    %220 = vmatprep.subr.mxu0 0.0
    %221 = vmatpush1.msra.mxu0 %v197
    %222 = vmatprep.subr.mxu0 0.0
    %223 = vmatpush1.msra.mxu0 %v198
    %224 = vmatprep.subr.mxu0 0.0
    %225 = vmatpush1.msra.mxu0 %v199
    %226 = vmatprep.subr.mxu0 0.0
    %227 = vmatpush1.msra.mxu0 %v200
    %228 = vmatprep.subr.mxu0 0.0
    %229 = vmatpush1.msra.mxu0 %v201
    %230 = vmatprep.subr.mxu0 0.0
    %231 = vmatpush1.msra.mxu0 %v202
    %232 = vmatprep.subr.mxu0 0.0
    %233 = vmatpush1.msra.mxu0 %v203
    %234 = vmatprep.subr.mxu0 0.0
    %235 = vmatpush1.msra.mxu0 %v204
    %236 = vmatprep.subr.mxu0 0.0
    %237 = vmatpush1.msra.mxu0 %v205
    %238 = vmatprep.subr.mxu0 0.0
    %239 = vmatpush1.msra.mxu0 %v206
    %240 = vmatprep.subr.mxu0 0.0
    %241 = vmatpush1.msra.mxu0 %v207
    %242 = vmatprep.subr.mxu0 0.0
    %243 = vmatpush1.msra.mxu0 %v208
    %244 = vmatprep.subr.mxu0 0.0
    %245 = vmatpush1.msra.mxu0 %v209
    %246 = vmatprep.subr.mxu0 0.0
    %247 = vmatpush1.msra.mxu0 %v210
    %248 = vmatprep.subr.mxu0 0.0
    %249 = vmatpush1.msra.mxu0 %v211
    %250 = vmatprep.subr.mxu0 0.0
    %251 = vmatpush1.msra.mxu0 %v212
    %252 = vmatprep.subr.mxu0 0.0
    %253 = vmatpush1.msra.mxu0 0.0
    %254 = vmatprep.subr.mxu0 0.0
    %255 = vmatpush1.msra.mxu0 0.0
    %256 = vmatprep.subr.mxu0 0.0
    %257 = vmatpush1.msra.mxu0 0.0
    %258 = vmatprep.subr.mxu0 0.0
    %259 = vmatpush1.msra.mxu0 0.0
    %260 = vmatprep.subr.mxu0 0.0
    %261 = vmatpush1.msra.mxu0 0.0
    %262 = vmatprep.subr.mxu0 0.0
    %263 = vmatpush1.msra.mxu0 0.0
    %264 = vmatprep.subr.mxu0 0.0
    %265 = vmatpush1.msra.mxu0 0.0
    %266 = vmatprep.subr.mxu0 0.0
    %267 = vmatpush1.msra.mxu0 0.0
    %268 = vmatprep.subr.mxu0 0.0
    %269 = vmatpush1.msra.mxu0 0.0
    %270 = vmatprep.subr.mxu0 0.0
    %271 = vmatpush1.msra.mxu0 0.0
    %272 = vmatprep.subr.mxu0 0.0
    %273 = vmatpush1.msra.mxu0 0.0
    %274 = vmatprep.subr.mxu0 0.0
    %275 = vmatpush1.msra.mxu0 0.0
    %276 = vmatprep.subr.mxu0 0.0
    %277 = vmatpush1.msra.mxu0 0.0
    %278 = vmatprep.subr.mxu0 0.0
    %279 = vmatpush1.msra.mxu0 0.0
    %280 = vmatprep.subr.mxu0 0.0
    %281 = vmatpush1.msra.mxu0 0.0
    %282 = vmatprep.subr.mxu0 0.0
    %283 = vmatpush1.msra.mxu0 0.0
    %284 = vmatprep.mubr.f32.mxu0 0.0
    %285 = vmatmul.mubr.f32.gmra.mrb[0].mxu0 %v196
    %v286 = vpop.f32.mrb[0].mxu0
    %v287 = vadd.f32 %v218, %v286
    %v288 = vpop.f32.mrb[0].mxu0
    %289 = vdwg.mxu0
    %v290 = vld [vmem:[%s8] sm:$0x1]
    %vm291 = vcmp.gt.f32.partialorder %v290, 0.0
    %v292 = vmax.f32 %v287, 0.0
    %v293 = vsel %vm291, 1, 0
    %v294 = vlaneseq
    %v295 = vshrl.u32 %v294, 7
    %v296 = vsub.s32 0, %v295
    %v297 = vrot.slane %v293, %v296
    %vm298 = vcmp.eq.s32.totalorder %v297, 1
    %v299 = vsel %vm298, %v292, %v287
    %300 = vst [vmem:[#allocation8] sm:$0x3] %v299
    // Predicated region
    $region50: #{tpu_custom_call.1} parent=1 // pred_check
      _
    $region51: #{tpu_custom_call.1} parent=1 // pred_check_branch
      %302 = sbr.rel (0) target = $region53
    $region52: #{tpu_custom_call.1} parent=1 // pred_region
      %s304 = ssub.s32 32, 32
      %305 = vsyncadd [#allocation4], %s304
      %s307 = sshll.u32 [#allocation8], 4
      %s308 = int_to_ptr.vmem [resolvable:$true] %s307
      %310 = dma.vmem_to_hbm [thread:$0]  %s308, 32, %s9, [#allocation4]
    $region53: #{tpu_custom_call.1} parent=1 // pred_fallthru
      _
    // Predicated region
    $region54: #{tpu_custom_call.1} parent=1 // pred_check
      _
    $region55: #{tpu_custom_call.1} parent=1 // pred_check_branch
      %312 = sbr.rel (0) target = $region57
    $region56: #{tpu_custom_call.1} parent=1 // pred_region
      %313 = dma.done [#allocation4], 32
    $region57: #{tpu_custom_call.1} parent=1 // pred_fallthru
      _
    %314 = vsyncpa [#allocation3], 1
    %315 = vsyncpa [#allocation6], 1
    %316 = vsyncpa [#allocation4], 1

// kernel: tpu_custom_call.1
$region0: #{tpu_custom_call.1}
  #allocation0 [shape = 'u32[]', space=smem, size = 0x4, offset = 0x4, fixed_abs, tag = 'smem constant byte address 0x4 - core index']
  #allocation1 [shape = 'u32[144,128]{1,0:T(1,128)}', space=vmem, size = 0x12000, scoped, tag = 'internal scratch']
  %s0 = inlined_call_operand.hbm [shape: f32[2,32], index: 0, kind: input, shape index: {}]
  %s1 = inlined_call_operand.hbm [shape: f32[32,128], index: 1, kind: input, shape index: {}]
  %s2 = inlined_call_operand.vmem [shape: f32[1,128], index: 2, kind: input, shape index: {}]
  %s3 = inlined_call_operand.vmem [shape: f32[1,128], index: 3, kind: input, shape index: {}]
  %s4 = inlined_call_operand.vmem [shape: f32[1,128], index: 4, kind: input, shape index: {}]
  %s5 = inlined_call_operand.vmem [shape: f32[1,128], index: 5, kind: input, shape index: {}]
  %s6 = inlined_call_operand.hbm [shape: f32[128,128], index: 6, kind: input, shape index: {}]
  %s7 = inlined_call_operand.vmem [shape: f32[1,128], index: 7, kind: input, shape index: {}]
  %s8 = inlined_call_operand.vmem [shape: f32[1,128], index: 8, kind: input, shape index: {}]
  %s9 = inlined_call_operand.hbm [shape: f32[2,128], index: 9, kind: output, shape index: {}]
  %s10 = sld [smem:[#allocation0]]
  $region58: #{tpu_custom_call.1} parent=0
    _
  %s12 = ssub.s32 1, %s10
  %s13 = scalar_select 0, %s12, %s10
  $region1: #{tpu_custom_call.1} parent=0
    #allocation2 [shape = 'u8[1024]{0}', space=vmem, size = 0x400, scoped, tag = 'input window, operand 0, single buffered']
    #allocation3 [shape = 's32[1]{0}', space=sflag, size = 0x4, scoped, tag = 'scoped memory for tpu_custom_call.1']
    #allocation4 [shape = 's32[1]{0}', space=sflag, size = 0x4, scoped, tag = 'scoped memory for tpu_custom_call.1']
    #allocation5 [shape = 'u8[16384]{0}', space=vmem, size = 0x4000, scoped, tag = 'input window, operand 1, single buffered']
    #allocation6 [shape = 's32[1]{0}', space=sflag, size = 0x4, scoped, tag = 'scoped memory for tpu_custom_call.1']
    #allocation7 [shape = 'u8[65536]{0}', space=vmem, size = 0x10000, scoped, tag = 'input window, operand 6, single buffered']
    #allocation8 [shape = 'u8[1024]{0}', space=vmem, size = 0x400, scoped, tag = 'output window, operand 0, single buffered']
    %14 = vsyncpa [#allocation3], 0
    %15 = vsyncpa [#allocation6], 0
    %16 = vsyncpa [#allocation4], 0
    // Predicated region
    $region2: #{tpu_custom_call.1} parent=1 // pred_check
      _
    $region3: #{tpu_custom_call.1} parent=1 // pred_check_branch
      %18 = sbr.rel (0) target = $region5
    $region4: #{tpu_custom_call.1} parent=1 // pred_region
      %s20 = ssub.s32 32, 32
      %21 = vsyncadd [#allocation3], %s20
      %s23 = sshll.u32 [#allocation2], 4
      %s24 = int_to_ptr.vmem [resolvable:$true] %s23
      %26 = dma.hbm_to_vmem [thread:$0]  %s0, 32, %s24, [#allocation3]
    $region5: #{tpu_custom_call.1} parent=1 // pred_fallthru
      _
    // Predicated region
    $region6: #{tpu_custom_call.1} parent=1 // pred_check
      _
    $region7: #{tpu_custom_call.1} parent=1 // pred_check_branch
      %28 = sbr.rel (0) target = $region9
    $region8: #{tpu_custom_call.1} parent=1 // pred_region
      %s30 = ssub.s32 512, 512
      %31 = vsyncadd [#allocation6], %s30
      %s32 = sshll.u32 [#allocation5], 4
      %s33 = int_to_ptr.vmem [resolvable:$true] %s32
      %38 = dma.hbm_to_vmem [thread:$0]  %s1, 512, %s33, [#allocation6], 128, 128, 8
    $region9: #{tpu_custom_call.1} parent=1 // pred_fallthru
      _
    // Predicated region
    $region10: #{tpu_custom_call.1} parent=1 // pred_check
      _
    $region11: #{tpu_custom_call.1} parent=1 // pred_check_branch
      %40 = sbr.rel (0) target = $region13
    $region12: #{tpu_custom_call.1} parent=1 // pred_region
      _
    $region13: #{tpu_custom_call.1} parent=1 // pred_fallthru
      _
    // Predicated region
    $region14: #{tpu_custom_call.1} parent=1 // pred_check
      _
    $region15: #{tpu_custom_call.1} parent=1 // pred_check_branch
      %42 = sbr.rel (0) target = $region17
    $region16: #{tpu_custom_call.1} parent=1 // pred_region
      _
    $region17: #{tpu_custom_call.1} parent=1 // pred_fallthru
      _
    // Predicated region
    $region18: #{tpu_custom_call.1} parent=1 // pred_check
      _
    $region19: #{tpu_custom_call.1} parent=1 // pred_check_branch
      %44 = sbr.rel (0) target = $region21
    $region20: #{tpu_custom_call.1} parent=1 // pred_region
      _
    $region21: #{tpu_custom_call.1} parent=1 // pred_fallthru
      _
    // Predicated region
    $region22: #{tpu_custom_call.1} parent=1 // pred_check
      _
    $region23: #{tpu_custom_call.1} parent=1 // pred_check_branch
      %46 = sbr.rel (0) target = $region25
    $region24: #{tpu_custom_call.1} parent=1 // pred_region
      _
    $region25: #{tpu_custom_call.1} parent=1 // pred_fallthru
      _
    // Predicated region
    $region26: #{tpu_custom_call.1} parent=1 // pred_check
      _
    $region27: #{tpu_custom_call.1} parent=1 // pred_check_branch
      %48 = sbr.rel (0) target = $region29
    $region28: #{tpu_custom_call.1} parent=1 // pred_region
      %s50 = ssub.s32 2048, 2048
      %51 = vsyncadd [#allocation6], %s50
      %s52 = sshll.u32 [#allocation7], 4
      %s53 = int_to_ptr.vmem [resolvable:$true] %s52
      %58 = dma.hbm_to_vmem [thread:$0]  %s6, 2048, %s53, [#allocation6], 128, 128, 8
    $region29: #{tpu_custom_call.1} parent=1 // pred_fallthru
      _
    // Predicated region
    $region30: #{tpu_custom_call.1} parent=1 // pred_check
      _
    $region31: #{tpu_custom_call.1} parent=1 // pred_check_branch
      %60 = sbr.rel (0) target = $region33
    $region32: #{tpu_custom_call.1} parent=1 // pred_region
      _
    $region33: #{tpu_custom_call.1} parent=1 // pred_fallthru
      _
    // Predicated region
    $region34: #{tpu_custom_call.1} parent=1 // pred_check
      _
    $region35: #{tpu_custom_call.1} parent=1 // pred_check_branch
      %62 = sbr.rel (0) target = $region37
    $region36: #{tpu_custom_call.1} parent=1 // pred_region
      _
    $region37: #{tpu_custom_call.1} parent=1 // pred_fallthru
      _
    // Predicated region
    $region38: #{tpu_custom_call.1} parent=1 // pred_check
      _
    $region39: #{tpu_custom_call.1} parent=1 // pred_check_branch
      %64 = sbr.rel (0) target = $region41
    $region40: #{tpu_custom_call.1} parent=1 // pred_region
      %65 = dma.done [#allocation3], 32
    $region41: #{tpu_custom_call.1} parent=1 // pred_fallthru
      _
    // Predicated region
    $region42: #{tpu_custom_call.1} parent=1 // pred_check
      _
    $region43: #{tpu_custom_call.1} parent=1 // pred_check_branch
      %67 = sbr.rel (0) target = $region45
    $region44: #{tpu_custom_call.1} parent=1 // pred_region
      %68 = dma.done [#allocation6], 512
    $region45: #{tpu_custom_call.1} parent=1 // pred_fallthru
      _
    // Predicated region
    $region46: #{tpu_custom_call.1} parent=1 // pred_check
      _
    $region47: #{tpu_custom_call.1} parent=1 // pred_check_branch
      %70 = sbr.rel (0) target = $region49
    $region48: #{tpu_custom_call.1} parent=1 // pred_region
      %71 = dma.done [#allocation6], 2048
    $region49: #{tpu_custom_call.1} parent=1 // pred_fallthru
      _
    %v72 = vld [vmem:[#allocation2] sm:$0x3]
    %v73 = vld [vmem:[#allocation5] sm:$0xff]
    %v74 = vld [vmem:[#allocation5 + $0x8] sm:$0xff]
    %v75 = vld [vmem:[#allocation5 + $0x10] sm:$0xff]
    %v76 = vld [vmem:[#allocation5 + $0x18] sm:$0xff]
    %v77 = vld [vmem:[%s2] sm:$0x1]
    %v79 = vlaneseq
    %v80 = vshrl.u32 %v79, 7
    %v81 = vsub.s32 0, %v80
    %v82 = vrot.slane %v77, %v81
    %vm84 = vcmask 261120
    %v86 = vsel %vm84, %v72, 0
    %88 = vmatprep.subr.mxu0 0.0
    %89 = vmatpush1.msra.mxu0 %v73
    %90 = vmatprep.subr.mxu0 0.0
    %91 = vmatpush1.msra.mxu0 %v74
    %92 = vmatprep.subr.mxu0 0.0
    %93 = vmatpush1.msra.mxu0 %v75
    %94 = vmatprep.subr.mxu0 0.0
    %95 = vmatpush1.msra.mxu0 %v76
    %96 = vmatprep.subr.mxu0 0.0
    %97 = vmatpush1.msra.mxu0 0.0
    %98 = vmatprep.subr.mxu0 0.0
    %99 = vmatpush1.msra.mxu0 0.0
    %100 = vmatprep.subr.mxu0 0.0
    %101 = vmatpush1.msra.mxu0 0.0
    %102 = vmatprep.subr.mxu0 0.0
    %103 = vmatpush1.msra.mxu0 0.0
    %104 = vmatprep.subr.mxu0 0.0
    %105 = vmatpush1.msra.mxu0 0.0
    %106 = vmatprep.subr.mxu0 0.0
    %107 = vmatpush1.msra.mxu0 0.0
    %108 = vmatprep.subr.mxu0 0.0
    %109 = vmatpush1.msra.mxu0 0.0
    %110 = vmatprep.subr.mxu0 0.0
    %111 = vmatpush1.msra.mxu0 0.0
    %112 = vmatprep.subr.mxu0 0.0
    %113 = vmatpush1.msra.mxu0 0.0
    %114 = vmatprep.subr.mxu0 0.0
    %115 = vmatpush1.msra.mxu0 0.0
    %116 = vmatprep.subr.mxu0 0.0
    %117 = vmatpush1.msra.mxu0 0.0
    %118 = vmatprep.subr.mxu0 0.0
    %119 = vmatpush1.msra.mxu0 0.0
    %120 = vmatprep.subr.mxu0 0.0
    %121 = vmatpush1.msra.mxu0 0.0
    %122 = vmatprep.subr.mxu0 0.0
    %123 = vmatpush1.msra.mxu0 0.0
    %124 = vmatprep.subr.mxu0 0.0
    %125 = vmatpush1.msra.mxu0 0.0
    %126 = vmatprep.subr.mxu0 0.0
    %127 = vmatpush1.msra.mxu0 0.0
    %128 = vmatprep.subr.mxu0 0.0
    %129 = vmatpush1.msra.mxu0 0.0
    %130 = vmatprep.subr.mxu0 0.0
    %131 = vmatpush1.msra.mxu0 0.0
    %132 = vmatprep.subr.mxu0 0.0
    %133 = vmatpush1.msra.mxu0 0.0
    %134 = vmatprep.subr.mxu0 0.0
    %135 = vmatpush1.msra.mxu0 0.0
    %136 = vmatprep.subr.mxu0 0.0
    %137 = vmatpush1.msra.mxu0 0.0
    %138 = vmatprep.subr.mxu0 0.0
    %139 = vmatpush1.msra.mxu0 0.0
    %140 = vmatprep.subr.mxu0 0.0
    %141 = vmatpush1.msra.mxu0 0.0
    %142 = vmatprep.subr.mxu0 0.0
    %143 = vmatpush1.msra.mxu0 0.0
    %144 = vmatprep.subr.mxu0 0.0
    %145 = vmatpush1.msra.mxu0 0.0
    %146 = vmatprep.subr.mxu0 0.0
    %147 = vmatpush1.msra.mxu0 0.0
    %148 = vmatprep.subr.mxu0 0.0
    %149 = vmatpush1.msra.mxu0 0.0
    %150 = vmatprep.subr.mxu0 0.0
    %151 = vmatpush1.msra.mxu0 0.0
    %152 = vmatprep.mubr.f32.mxu0 0.0
    %153 = vmatmul.mubr.f32.gmra.mrb[0].mxu0 %v86
    %v154 = vpop.f32.mrb[0].mxu0
    %v155 = vadd.f32 %v82, %v154
    %v156 = vpop.f32.mrb[0].mxu0
    %157 = vdwg.mxu0
    %vm158 = vcmask 1041408
    %v159 = vsel %vm158, %v155, 0.0
    %160 = vadd.xlane.f32.xlu0 %v159
    %v161 = vpop.xlane.xlu0 %160
    %v162 = vmul.f32 %v161, 0.0625
    %v163 = vsub.f32 %v155, %v162
    %v164 = vld [vmem:[%s5] sm:$0x1]
    %v166 = vlaneseq
    %v167 = vshrl.u32 %v166, 7
    %v168 = vsub.s32 0, %v167
    %v169 = vrot.slane %v164, %v168
    %v171 = vmul.f32 %v163, %v169
    %v172 = vmul.f32 %v171, %v171
    %v173 = vsel %vm158, %v172, 0.0
    %174 = vadd.xlane.f32.xlu0 %v173
    %v175 = vpop.xlane.xlu0 %174
    %v176 = vmul.f32 %v175, 0.0625
    %v177 = vadd.f32 %v176, 1e-05
    %v178 = vrsqrt.pop %v177
    %v179 = vmul.f32 %v163, %v178
    %v180 = vld [vmem:[%s3] sm:$0x1]
    %v182 = vlaneseq
    %v183 = vshrl.u32 %v182, 7
    %v184 = vsub.s32 0, %v183
    %v185 = vrot.slane %v180, %v184
    %v187 = vmul.f32 %v179, %v185
    %v188 = vld [vmem:[%s4] sm:$0x1]
    %v190 = vlaneseq
    %v191 = vshrl.u32 %v190, 7
    %v192 = vsub.s32 0, %v191
    %v193 = vrot.slane %v188, %v192
    %v195 = vadd.f32 %v187, %v193
    %v196 = vmax.f32 %v195, 0.0
    %v197 = vld [vmem:[#allocation7] sm:$0xff]
    %v198 = vld [vmem:[#allocation7 + $0x8] sm:$0xff]
    %v199 = vld [vmem:[#allocation7 + $0x10] sm:$0xff]
    %v200 = vld [vmem:[#allocation7 + $0x18] sm:$0xff]
    %v201 = vld [vmem:[#allocation7 + $0x20] sm:$0xff]
    %v202 = vld [vmem:[#allocation7 + $0x28] sm:$0xff]
    %v203 = vld [vmem:[#allocation7 + $0x30] sm:$0xff]
    %v204 = vld [vmem:[#allocation7 + $0x38] sm:$0xff]
    %v205 = vld [vmem:[#allocation7 + $0x40] sm:$0xff]
    %v206 = vld [vmem:[#allocation7 + $0x48] sm:$0xff]
    %v207 = vld [vmem:[#allocation7 + $0x50] sm:$0xff]
    %v208 = vld [vmem:[#allocation7 + $0x58] sm:$0xff]
    %v209 = vld [vmem:[#allocation7 + $0x60] sm:$0xff]
    %v210 = vld [vmem:[#allocation7 + $0x68] sm:$0xff]
    %v211 = vld [vmem:[#allocation7 + $0x70] sm:$0xff]
    %v212 = vld [vmem:[#allocation7 + $0x78] sm:$0xff]
    %v213 = vld [vmem:[%s7] sm:$0x1]
    %v215 = vlaneseq
    %v216 = vshrl.u32 %v215, 7
    %v217 = vsub.s32 0, %v216
    %v218 = vrot.slane %v213, %v217
    %220 = vmatprep.subr.mxu0 0.0
    %221 = vmatpush1.msra.mxu0 %v197
    %222 = vmatprep.subr.mxu0 0.0
    %223 = vmatpush1.msra.mxu0 %v198
    %224 = vmatprep.subr.mxu0 0.0
    %225 = vmatpush1.msra.mxu0 %v199
    %226 = vmatprep.subr.mxu0 0.0
    %227 = vmatpush1.msra.mxu0 %v200
    %228 = vmatprep.subr.mxu0 0.0
    %229 = vmatpush1.msra.mxu0 %v201
    %230 = vmatprep.subr.mxu0 0.0
    %231 = vmatpush1.msra.mxu0 %v202
    %232 = vmatprep.subr.mxu0 0.0
    %233 = vmatpush1.msra.mxu0 %v203
    %234 = vmatprep.subr.mxu0 0.0
    %235 = vmatpush1.msra.mxu0 %v204
    %236 = vmatprep.subr.mxu0 0.0
    %237 = vmatpush1.msra.mxu0 %v205
    %238 = vmatprep.subr.mxu0 0.0
    %239 = vmatpush1.msra.mxu0 %v206
    %240 = vmatprep.subr.mxu0 0.0
    %241 = vmatpush1.msra.mxu0 %v207
    %242 = vmatprep.subr.mxu0 0.0
    %243 = vmatpush1.msra.mxu0 %v208
    %244 = vmatprep.subr.mxu0 0.0
    %245 = vmatpush1.msra.mxu0 %v209
    %246 = vmatprep.subr.mxu0 0.0
    %247 = vmatpush1.msra.mxu0 %v210
    %248 = vmatprep.subr.mxu0 0.0
    %249 = vmatpush1.msra.mxu0 %v211
    %250 = vmatprep.subr.mxu0 0.0
    %251 = vmatpush1.msra.mxu0 %v212
    %252 = vmatprep.subr.mxu0 0.0
    %253 = vmatpush1.msra.mxu0 0.0
    %254 = vmatprep.subr.mxu0 0.0
    %255 = vmatpush1.msra.mxu0 0.0
    %256 = vmatprep.subr.mxu0 0.0
    %257 = vmatpush1.msra.mxu0 0.0
    %258 = vmatprep.subr.mxu0 0.0
    %259 = vmatpush1.msra.mxu0 0.0
    %260 = vmatprep.subr.mxu0 0.0
    %261 = vmatpush1.msra.mxu0 0.0
    %262 = vmatprep.subr.mxu0 0.0
    %263 = vmatpush1.msra.mxu0 0.0
    %264 = vmatprep.subr.mxu0 0.0
    %265 = vmatpush1.msra.mxu0 0.0
    %266 = vmatprep.subr.mxu0 0.0
    %267 = vmatpush1.msra.mxu0 0.0
    %268 = vmatprep.subr.mxu0 0.0
    %269 = vmatpush1.msra.mxu0 0.0
    %270 = vmatprep.subr.mxu0 0.0
    %271 = vmatpush1.msra.mxu0 0.0
    %272 = vmatprep.subr.mxu0 0.0
    %273 = vmatpush1.msra.mxu0 0.0
    %274 = vmatprep.subr.mxu0 0.0
    %275 = vmatpush1.msra.mxu0 0.0
    %276 = vmatprep.subr.mxu0 0.0
    %277 = vmatpush1.msra.mxu0 0.0
    %278 = vmatprep.subr.mxu0 0.0
    %279 = vmatpush1.msra.mxu0 0.0
    %280 = vmatprep.subr.mxu0 0.0
    %281 = vmatpush1.msra.mxu0 0.0
    %282 = vmatprep.subr.mxu0 0.0
    %283 = vmatpush1.msra.mxu0 0.0
    %284 = vmatprep.mubr.f32.mxu0 0.0
    %285 = vmatmul.mubr.f32.gmra.mrb[0].mxu0 %v196
    %v286 = vpop.f32.mrb[0].mxu0
    %v287 = vadd.f32 %v218, %v286
    %v288 = vpop.f32.mrb[0].mxu0
    %289 = vdwg.mxu0
    %v290 = vld [vmem:[%s8] sm:$0x1]
    %vm291 = vcmp.gt.f32.partialorder %v290, 0.0
    %v292 = vmax.f32 %v287, 0.0
    %v293 = vsel %vm291, 1, 0
    %v294 = vlaneseq
    %v295 = vshrl.u32 %v294, 7
    %v296 = vsub.s32 0, %v295
    %v297 = vrot.slane %v293, %v296
    %vm298 = vcmp.eq.s32.totalorder %v297, 1
    %v299 = vsel %vm298, %v292, %v287
    %300 = vst [vmem:[#allocation8] sm:$0x3] %v299
    // Predicated region
    $region50: #{tpu_custom_call.1} parent=1 // pred_check
      _
    $region51: #{tpu_custom_call.1} parent=1 // pred_check_branch
      %302 = sbr.rel (0) target = $region53
    $region52: #{tpu_custom_call.1} parent=1 // pred_region
      %s304 = ssub.s32 32, 32
      %305 = vsyncadd [#allocation4], %s304
      %s307 = sshll.u32 [#allocation8], 4
      %s308 = int_to_ptr.vmem [resolvable:$true] %s307
      %310 = dma.vmem_to_hbm [thread:$0]  %s308, 32, %s9, [#allocation4]
    $region53: #{tpu_custom_call.1} parent=1 // pred_fallthru
      _
    // Predicated region
    $region54: #{tpu_custom_call.1} parent=1 // pred_check
      _
    $region55: #{tpu_custom_call.1} parent=1 // pred_check_branch
      %312 = sbr.rel (0) target = $region57
    $region56: #{tpu_custom_call.1} parent=1 // pred_region
      %313 = dma.done [#allocation4], 32
    $region57: #{tpu_custom_call.1} parent=1 // pred_fallthru
      _
    %314 = vsyncpa [#allocation3], 1
    %315 = vsyncpa [#allocation6], 1
    %316 = vsyncpa [#allocation4], 1

</llo_original>
